<compile_context>
chip_gen: v6e
topology: v6e:2x2x1
jax: 0.10.0
libtpu: 0.0.40
codegen_flags: <defaults>
</compile_context>

<pallas_src>
import functools

import jax
import jax.numpy as jnp
from jax import lax
from jax.experimental import pallas as pl
from jax.experimental.pallas import tpu as pltpu


# ---------------------------------------------------------------------------
# Plain-JAX grouping glue (FPS / ball query / gathers) — mirrors the torch code
# ---------------------------------------------------------------------------
def square_distance(src, dst):
    # src: [B, N, C], dst: [B, M, C] -> [B, N, M]
    dist = -2.0 * jnp.matmul(src, jnp.transpose(dst, (0, 2, 1)))
    dist = dist + jnp.sum(src ** 2, -1)[:, :, None]
    dist = dist + jnp.sum(dst ** 2, -1)[:, None, :]
    return dist


def index_points(points, idx):
    # points: [B, N, C], idx: [B, ...] -> [B, ..., C]
    return jax.vmap(lambda p, i: p[i])(points, idx)


def farthest_point_sample(key, xyz, npoint):
    # TODO(synk): torch uses torch.randint for the start point (not
    # bit-reproducible); we use jax.random with a fixed key for determinism.
    B, N, _ = xyz.shape
    distance0 = jnp.full((B, N), 1e10, dtype=jnp.float32)
    farthest0 = jax.random.randint(key, (B,), 0, N)
    batch_idx = jnp.arange(B)
    centroids0 = jnp.zeros((B, npoint), dtype=jnp.int32)

    def body(i, carry):
        centroids, distance, farthest = carry
        centroids = centroids.at[:, i].set(farthest)
        centroid = xyz[batch_idx, farthest][:, None, :]          # [B, 1, 3]
        dist = jnp.sum((xyz - centroid) ** 2, -1)                # [B, N]
        distance = jnp.minimum(distance, dist)
        farthest = jnp.argmax(distance, axis=-1).astype(jnp.int32)
        return centroids, distance, farthest

    centroids, _, _ = lax.fori_loop(0, npoint, body,
                                    (centroids0, distance0, farthest0))
    return centroids                                             # [B, npoint]


def query_ball_point(radius, nsample, xyz, new_xyz):
    B, N, _ = xyz.shape
    S = new_xyz.shape[1]
    sqrdists = square_distance(new_xyz, xyz)                     # [B, S, N]
    group_idx = jnp.broadcast_to(jnp.arange(N, dtype=jnp.int32)[None, None, :],
                                 (B, S, N))
    group_idx = jnp.where(sqrdists > radius ** 2, N, group_idx)
    group_idx = jnp.sort(group_idx, axis=-1)[:, :, :nsample]
    group_first = group_idx[:, :, :1]
    group_idx = jnp.where(group_idx == N, group_first, group_idx)
    return group_idx                                             # [B, S, nsample]


def sample_and_group(npoint, radius, nsample, xyz, points, fps_key):
    B, N, C = xyz.shape
    fps_idx = farthest_point_sample(fps_key, xyz, npoint)        # [B, npoint]
    new_xyz = index_points(xyz, fps_idx)                         # [B, npoint, C]
    idx = query_ball_point(radius, nsample, xyz, new_xyz)        # [B, npoint, nsample]
    grouped_xyz = index_points(xyz, idx)                         # [B, npoint, nsample, C]
    grouped_xyz = grouped_xyz - new_xyz[:, :, None, :]
    if points is not None:
        grouped_points = index_points(points, idx)               # [B, npoint, nsample, D]
        new_points = jnp.concatenate([grouped_xyz, grouped_points], axis=-1)
    else:
        new_points = grouped_xyz
    return new_xyz, new_points
    # TODO(synk): materializing [B,S,K,Cin] in HBM costs one extra write+read;
    # the remaining big win is gathering rows inside the first Pallas kernel
    # via PrefetchScalarGridSpec (ball-query indices in SMEM + manual DMA
    # row gather), removing this pass plus the cast/pad XLA kernels.


# ---------------------------------------------------------------------------
# Pallas kernels
# ---------------------------------------------------------------------------
def _mm_stats_kernel(x_ref, w_ref, h_ref, ssum_ref, ssq_ref):
    """bf16 matmul (1x1 conv, bias cancelled by BN) + per-tile BN partial sums."""
    h = jnp.dot(x_ref[...], w_ref[...], preferred_element_type=jnp.float32)
    h_ref[...] = h.astype(jnp.bfloat16)
    ssum_ref[...] = jnp.sum(h, axis=0, keepdims=True)[None]
    ssq_ref[...] = jnp.sum(h * h, axis=0, keepdims=True)[None]


def _mm_stats_maxmin_kernel(K, x_ref, w_ref, hmax_ref, hmin_ref, ssum_ref, ssq_ref):
    """Single-layer-MLP variant: no full activation write; emit per-point
    max/min of the raw conv output over K plus BN partial sums."""
    h = jnp.dot(x_ref[...], w_ref[...], preferred_element_type=jnp.float32)
    ssum_ref[...] = jnp.sum(h, axis=0, keepdims=True)[None]
    ssq_ref[...] = jnp.sum(h * h, axis=0, keepdims=True)[None]
    rows, c = h.shape
    h3 = h.reshape(rows // K, K, c)            # K % 8 == 0 -> sublane-aligned
    hmax_ref[...] = jnp.max(h3, axis=1)
    hmin_ref[...] = jnp.min(h3, axis=1)


def _bn_relu_mm_stats_kernel(h_ref, s_ref, t_ref, w_ref, o_ref, ssum_ref, ssq_ref):
    """Apply previous layer's folded BN (h*s + t) + ReLU, then bf16 matmul of
    the current layer + per-tile BN partial sums."""
    a = h_ref[...].astype(jnp.float32) * s_ref[...] + t_ref[...]
    a = jnp.maximum(a, 0.0).astype(jnp.bfloat16)
    o = jnp.dot(a, w_ref[...], preferred_element_type=jnp.float32)
    o_ref[...] = o.astype(jnp.bfloat16)
    ssum_ref[...] = jnp.sum(o, axis=0, keepdims=True)[None]
    ssq_ref[...] = jnp.sum(o * o, axis=0, keepdims=True)[None]


def _bn_relu_mm_stats_maxmin_kernel(K, h_ref, s_ref, t_ref, w_ref,
                                    hmax_ref, hmin_ref, ssum_ref, ssq_ref):
    """Last-layer kernel: previous BN+ReLU, matmul, BN partial sums, and the
    max-over-K reduction fused in.  Both max AND min of the raw output are
    carried so the later BN (possibly negative gamma) + ReLU + max is exact."""
    a = h_ref[...].astype(jnp.float32) * s_ref[...] + t_ref[...]
    a = jnp.maximum(a, 0.0).astype(jnp.bfloat16)
    o = jnp.dot(a, w_ref[...], preferred_element_type=jnp.float32)
    ssum_ref[...] = jnp.sum(o, axis=0, keepdims=True)[None]
    ssq_ref[...] = jnp.sum(o * o, axis=0, keepdims=True)[None]
    rows, c = o.shape
    o3 = o.reshape(rows // K, K, c)
    hmax_ref[...] = jnp.max(o3, axis=1)
    hmin_ref[...] = jnp.min(o3, axis=1)


def _final_bn_relu_maxmin_kernel(hmax_ref, hmin_ref, s_ref, t_ref, o_ref):
    """relu(s*h + t) is monotone in h, so its max over K is attained at either
    the raw max or the raw min of the activations."""
    s = s_ref[...]
    t = t_ref[...]
    o_ref[...] = jnp.maximum(jnp.maximum(hmax_ref[...] * s + t, 0.0),
                             jnp.maximum(hmin_ref[...] * s + t, 0.0))


def _bn_relu_maxk_kernel(K, h_ref, s_ref, t_ref, o_ref):
    """Fallback (K % 8 != 0): apply last folded BN + ReLU on the full bf16
    activation slab, then max over the K (nsample) axis."""
    # TODO(synk): for K not a multiple of 8 this reshape forces a relayout; a
    # strip-wise jnp.maximum tree would avoid it.
    a = h_ref[...].astype(jnp.float32) * s_ref[...] + t_ref[...]
    a = jnp.maximum(a, 0.0)
    rows, c = a.shape
    o_ref[...] = jnp.max(a.reshape(rows // K, K, c), axis=1)


# ---------------------------------------------------------------------------
# Tiling / VMEM budgeting helpers
# ---------------------------------------------------------------------------
def _round_up(x, m):
    return ((x + m - 1) // m) * m


def _pad_lanes(c):
    """Channel padding for intermediate/output slabs.  <= 64 channels stay at
    lane width 64 (halves HBM bytes of those memory-bound layers); larger
    counts round up to 128 (MXU-native, unmasked stores)."""
    return _round_up(c, 64) if c <= 64 else _round_up(c, 128)


def _vmem_capacity_bytes():
    """Physical VMEM per TensorCore (64 MiB on v7x, 128 MiB on v5e/v6e)."""
    try:
        cap = getattr(pltpu.get_tpu_info(), "vmem_capacity_bytes", None)
        if cap:
            return int(cap)
    except Exception:
        pass
    return 64 * 1024 * 1024          # conservative default (v7x per-TC)


def _tile_footprint_bytes(tm, K, cin_max, cpad_max):
    """True per-grid-step VMEM footprint: double-buffered bf16 input/output
    blocks, f32 BN-apply ('a') and matmul ('o') temporaries, bf16 weights."""
    rows = tm * K
    return (rows * cin_max * (2 * 2 + 4)        # bf16 in (x2 buffers) + f32 'a'
            + rows * cpad_max * (2 * 2 + 4)     # bf16 out (x2 buffers) + f32 'o'
            + cin_max * cpad_max * 2 * 2)       # bf16 weights (x2 buffers)


def _choose_tm(M, K, cin_max, cpad_max, budget_bytes, min_tiles=4):
    """Largest power-of-two tile (in B*S rows) dividing M that fits the VMEM
    budget, preferring a grid of >= min_tiles steps so both v7x TensorCores
    get work and the DMA pipeline keeps prologue/epilogue overlap."""
    cands = []
    tm = 8
    while tm <= M:
        if M % tm == 0 and (tm * K) % 16 == 0:
            cands.append(tm)
        tm *= 2
    if not cands:
        return M                                 # full-array blocks always legal
    fitting = [t for t in cands
               if _tile_footprint_bytes(t, K, cin_max, cpad_max) <= budget_bytes]
    if not fitting:
        return cands[0]
    for want in (min_tiles, 2, 1):
        ok = [t for t in fitting if M // t >= want]
        if ok:
            return max(ok)
    return max(fitting)


# ---------------------------------------------------------------------------
# Wrapper: tiled MLP stack + max over nsample
# ---------------------------------------------------------------------------
def pointnet_sa_mlp_max(x_flat, params, M, K, *, tm=None, eps=1e-5):
    """x_flat: [M*K, Cin] (M-outer / K-inner rows, channels last).
    params: list of (w [Cin_l, Cout_l], gamma [Cout_l], beta [Cout_l]).
    Returns [M, Cout_last] float32."""
    MK, cin0 = x_flat.shape
    assert MK == M * K

    x_flat = x_flat.astype(jnp.bfloat16)
    cin0_pad = _round_up(cin0, 8)                     # zero columns: exact
    if cin0_pad != cin0:
        x_flat = jnp.pad(x_flat, ((0, 0), (0, cin0_pad - cin0)))

    couts = [w.shape[1] for (w, _, _) in params]
    cpads = [_pad_lanes(c) for c in couts]
    cin_max = max([cin0_pad] + cpads[:-1])
    cpad_max = max(cpads)

    fuse_max = (K % 8 == 0)        # fused max/min path needs sublane-aligned K

    vmem_cap = _vmem_capacity_bytes()
    # Leave headroom for Mosaic internal scratch; cap well under 64 MiB on v7x.
    vmem_limit = min(int(vmem_cap * 5 // 8), 80 * 1024 * 1024)
    if tm is None:
        tm = _choose_tm(M, K, cin_max, cpad_max,
                        budget_bytes=int(vmem_limit * 0.6))
    assert M % tm == 0 and (tm == M or (tm % 8 == 0 and (tm * K) % 16 == 0)), \
        "tile must divide M and keep blocks sublane-aligned"
    n_tiles = M // tm
    rows = tm * K

    cparams = pltpu.CompilerParams(
        dimension_semantics=("parallel",),            # megacore-friendly
        vmem_limit_bytes=vmem_limit)

    h = x_flat
    cin_cur = cin0_pad
    scale = shift = None
    hmax = hmin = None
    count = jnp.float32(M * K)
    L = len(params)

    for l, (w, gamma, beta) in enumerate(params):
        cout, cpad = couts[l], cpads[l]
        last = (l == L - 1)
        # Pad weights: rows to current (padded) Cin, cols to padded Cout. Zero
        # padding is mathematically inert (padded channels stay exactly 0).
        w_p = jnp.zeros((cin_cur, cpad), jnp.bfloat16)
        w_p = w_p.at[: w.shape[0], :cout].set(w.astype(jnp.bfloat16))

        stats_shapes = [jax.ShapeDtypeStruct((n_tiles, 1, cpad), jnp.float32),
                        jax.ShapeDtypeStruct((n_tiles, 1, cpad), jnp.float32)]
        stats_specs = [pl.BlockSpec((1, 1, cpad), lambda i: (i, 0, 0)),
                       pl.BlockSpec((1, 1, cpad), lambda i: (i, 0, 0))]

        if last and fuse_max:
            out_shapes = [jax.ShapeDtypeStruct((M, cpad), jnp.float32),
                          jax.ShapeDtypeStruct((M, cpad), jnp.float32)] + stats_shapes
            out_specs = [pl.BlockSpec((tm, cpad), lambda i: (i, 0)),
                         pl.BlockSpec((tm, cpad), lambda i: (i, 0))] + stats_specs
        else:
            out_shapes = [jax.ShapeDtypeStruct((M * K, cpad), jnp.bfloat16)] + stats_shapes
            out_specs = [pl.BlockSpec((rows, cpad), lambda i: (i, 0))] + stats_specs

        if l == 0:
            kern = (functools.partial(_mm_stats_maxmin_kernel, K)
                    if (last and fuse_max) else _mm_stats_kernel)
            results = pl.pallas_call(
                kern,
                grid=(n_tiles,),
                in_specs=[pl.BlockSpec((rows, cin_cur), lambda i: (i, 0)),
                          pl.BlockSpec((cin_cur, cpad), lambda i: (0, 0))],
                out_specs=out_specs,
                out_shape=out_shapes,
                compiler_params=cparams,
            )(h, w_p)
        else:
            kern = (functools.partial(_bn_relu_mm_stats_maxmin_kernel, K)
                    if (last and fuse_max) else _bn_relu_mm_stats_kernel)
            results = pl.pallas_call(
                kern,
                grid=(n_tiles,),
                in_specs=[pl.BlockSpec((rows, cin_cur), lambda i: (i, 0)),
                          pl.BlockSpec((1, cin_cur), lambda i: (0, 0)),
                          pl.BlockSpec((1, cin_cur), lambda i: (0, 0)),
                          pl.BlockSpec((cin_cur, cpad), lambda i: (0, 0))],
                out_specs=out_specs,
                out_shape=out_shapes,
                compiler_params=cparams,
            )(h, scale, shift, w_p)

        if last and fuse_max:
            hmax, hmin, ssum_p, ssq_p = results
        else:
            h_next, ssum_p, ssq_p = results

        # Fold training-mode BN (biased var over all B*S*K rows) into one
        # per-channel scale/shift on tiny vectors (plain JAX, f32).
        # TODO(synk): could be folded into the next pallas_call under
        # pl.when(i == 0) (partials + gamma/beta in SMEM) to remove a handful
        # of micro-kernels between layers; sum-of-squares variance kept with a
        # non-negativity guard (switch to Chan's formula if drift observed).
        ssum = jnp.sum(ssum_p[:, 0, :], axis=0)
        ssq = jnp.sum(ssq_p[:, 0, :], axis=0)
        mu = ssum / count
        var = jnp.maximum(ssq / count - mu * mu, 0.0)
        g_p = jnp.zeros((cpad,), jnp.float32).at[:cout].set(gamma.astype(jnp.float32))
        b_p = jnp.zeros((cpad,), jnp.float32).at[:cout].set(beta.astype(jnp.float32))
        s = g_p * lax.rsqrt(var + eps)
        t = b_p - mu * s
        scale, shift = s[None, :], t[None, :]

        if not (last and fuse_max):
            h = h_next
        cin_cur = cpad

    if fuse_max:
        # Final pass reads only the [M, C] max/min slabs (not [M*K, C]).
        out = pl.pallas_call(
            _final_bn_relu_maxmin_kernel,
            grid=(n_tiles,),
            in_specs=[pl.BlockSpec((tm, cin_cur), lambda i: (i, 0)),
                      pl.BlockSpec((tm, cin_cur), lambda i: (i, 0)),
                      pl.BlockSpec((1, cin_cur), lambda i: (0, 0)),
                      pl.BlockSpec((1, cin_cur), lambda i: (0, 0))],
            out_specs=pl.BlockSpec((tm, cin_cur), lambda i: (i, 0)),
            out_shape=jax.ShapeDtypeStruct((M, cin_cur), jnp.float32),
            compiler_params=cparams,
        )(hmax, hmin, scale, shift)
    else:
        out = pl.pallas_call(
            functools.partial(_bn_relu_maxk_kernel, K),
            grid=(n_tiles,),
            in_specs=[pl.BlockSpec((rows, cin_cur), lambda i: (i, 0)),
                      pl.BlockSpec((1, cin_cur), lambda i: (0, 0)),
                      pl.BlockSpec((1, cin_cur), lambda i: (0, 0))],
            out_specs=pl.BlockSpec((tm, cin_cur), lambda i: (i, 0)),
            out_shape=jax.ShapeDtypeStruct((M, cin_cur), jnp.float32),
            compiler_params=cparams,
        )(h, scale, shift)

    return out[:, : couts[-1]]                        # slice off channel padding


# ---------------------------------------------------------------------------
# Module-level forward (matches PointNetSetAbstraction.forward)
# ---------------------------------------------------------------------------
def pointnet_set_abstraction_forward(xyz, points, npoint, radius, nsample,
                                     params, group_all, fps_key, tm=None):
    # xyz: [B, 3, N], points: [B, D, N]  (torch convention)
    xyz_t = jnp.transpose(xyz, (0, 2, 1))                        # [B, N, 3]
    points_t = jnp.transpose(points, (0, 2, 1)) if points is not None else None

    if group_all:
        B, N, C = xyz_t.shape
        new_xyz = jnp.zeros((B, 1, C), dtype=xyz_t.dtype)
        grouped = xyz_t[:, None, :, :]
        if points_t is not None:
            grouped = jnp.concatenate([grouped, points_t[:, None, :, :]], axis=-1)
        new_points = grouped                                     # [B, 1, N, C+D]
        S, K = 1, N
    else:
        new_xyz, new_points = sample_and_group(
            npoint, radius, nsample, xyz_t, points_t, fps_key)   # [B,S,3], [B,S,K,C+D]
        S, K = npoint, nsample

    B = new_points.shape[0]
    cin = new_points.shape[-1]
    M = B * S

    # M-outer / K-inner flattening: [B,S,K,Cin] -> [(B*S)*K, Cin] (row-major).
    x_flat = new_points.reshape(M * K, cin)
    out = pointnet_sa_mlp_max(x_flat, params, M, K, tm=tm)       # [M, Cout]
    out = out.reshape(B, S, -1)

    new_points_out = jnp.transpose(out, (0, 2, 1))               # [B, Cout, S]
    new_xyz_out = jnp.transpose(new_xyz, (0, 2, 1))              # [B, 3, S]
    return new_xyz_out, new_points_out


def init_params(key, in_channel, mlp):
    """Synthetic init mirroring Conv2d(.,.,1)+BatchNorm2d. Conv bias is omitted
    on purpose: training-mode BN subtracts the batch mean, cancelling it exactly."""
    params = []
    last = in_channel
    for i, out_ch in enumerate(mlp):
        kw = jax.random.fold_in(key, i)
        bound = 1.0 / float(last) ** 0.5
        w = jax.random.uniform(kw, (last, out_ch), jnp.float32, -bound, bound)
        gamma = jnp.ones((out_ch,), jnp.float32)                 # BN default init
        beta = jnp.zeros((out_ch,), jnp.float32)
        params.append((w, gamma, beta))
        last = out_ch
    return params


def _reference_mlp_max(grouped, params, eps=1e-5):
    """Pure-JAX f32 reference of the conv+BN(train)+ReLU stack + max over K."""
    h = grouped.astype(jnp.float32)                              # [B,S,K,Cin]
    for (w, gamma, beta) in params:
        h = jnp.einsum("bskc,cd->bskd", h, w)
        mu = jnp.mean(h, axis=(0, 1, 2))
        var = jnp.mean((h - mu) ** 2, axis=(0, 1, 2))
        h = (h - mu) * lax.rsqrt(var + eps) * gamma + beta
        h = jnp.maximum(h, 0.0)
    return jnp.max(h, axis=2)                                    # [B,S,Cout]


if __name__ == "__main__":
    B, N, D = 2, 32, 4
    npoint, radius, nsample = 8, 0.4, 8
    mlp = [16, 32]
    in_channel = D + 3          # grouped xyz (3) + point features (D)

    key = jax.random.PRNGKey(0)
    k_xyz, k_pts, k_fps, k_par = jax.random.split(key, 4)

    xyz = jax.random.uniform(k_xyz, (B, 3, N), dtype=jnp.float32)     # [B, C, N]
    points = jax.random.normal(k_pts, (B, D, N), dtype=jnp.float32)   # [B, D, N]
    params = init_params(k_par, in_channel, mlp)

    # tm=8 -> M=16 is processed as a 2-step grid (exercises the tiled path).
    new_xyz, new_feat = pointnet_set_abstraction_forward(
        xyz, points, npoint, radius, nsample, params,
        group_all=False, fps_key=k_fps, tm=8)
    jax.block_until_ready((new_xyz, new_feat))

    assert new_xyz.shape == (B, 3, npoint)
    assert new_feat.shape == (B, mlp[-1], npoint)

    # Correctness check against a pure-JAX f32 reference (loose tol: bf16 MXU).
    xyz_t = jnp.transpose(xyz, (0, 2, 1))
    pts_t = jnp.transpose(points, (0, 2, 1))
    _, grouped = sample_and_group(npoint, radius, nsample, xyz_t, pts_t, k_fps)
    ref = jnp.transpose(_reference_mlp_max(grouped, params), (0, 2, 1))
    err = float(jnp.max(jnp.abs(ref - new_feat)))
    assert err < 0.1, f"max abs err vs reference too large: {err}"

    print("KERNEL_OK")
</pallas_src>

<mosaic_0001>
module attributes {stable_mosaic.version = 11 : i64} {
  func.func @_mm_stats_kernel(%arg0: i32, %arg1: memref<64x8xbf16, #tpu.memory_space<vmem>>, %arg2: memref<8x64xbf16, #tpu.memory_space<vmem>>, %arg3: memref<64x64xbf16, #tpu.memory_space<vmem>>, %arg4: memref<1x1x64xf32, #tpu.memory_space<vmem>>, %arg5: memref<1x1x64xf32, #tpu.memory_space<vmem>>) attributes {dimension_semantics = [#tpu.dimension_semantics<parallel>], iteration_bounds = array<i64: 2>, scalar_prefetch = 0 : i64, scratch_operands = 0 : i64, tpu.core_type = #tpu.core_type<tc>, window_params = [{transform_indices = @transform_0, window_bounds = array<i64: 64, 8>}, {pipeline_mode = #tpu.pipeline_mode<synchronous>, transform_indices = @transform_1, window_bounds = array<i64: 8, 64>}, {transform_indices = @transform_2, window_bounds = array<i64: 64, 64>}, {transform_indices = @transform_3, window_bounds = array<i64: 1, 1, 64>}, {transform_indices = @transform_4, window_bounds = array<i64: 1, 1, 64>}]} {
    %c0 = arith.constant 0 : index
    %c0_0 = arith.constant 0 : index
    %0 = vector.load %arg1[%c0, %c0_0] : memref<64x8xbf16, #tpu.memory_space<vmem>>, vector<64x8xbf16>
    %c0_1 = arith.constant 0 : index
    %c0_2 = arith.constant 0 : index
    %1 = vector.load %arg2[%c0_1, %c0_2] : memref<8x64xbf16, #tpu.memory_space<vmem>>, vector<8x64xbf16>
    %cst = arith.constant dense<0.000000e+00> : vector<64x64xf32>
    %2 = tpu.matmul %0, %1, %cst {dimension_numbers = #tpu.dot_dimension_numbers<[1], [0], [0], [1], [0, 0, 1, 1], [], []>} : vector<64x8xbf16>, vector<8x64xbf16>, vector<64x64xf32> -> vector<64x64xf32>
    %3 = arith.truncf %2 : vector<64x64xf32> to vector<64x64xbf16>
    %c0_3 = arith.constant 0 : index
    %c0_4 = arith.constant 0 : index
    %4 = vector.load %arg3[%c0_3, %c0_4] : memref<64x64xbf16, #tpu.memory_space<vmem>>, vector<64x64xbf16>
    tpu.vector_store %arg3[%c0_3, %c0_4], %3 {strides = array<i32>} : memref<64x64xbf16, #tpu.memory_space<vmem>>, vector<64x64xbf16>,
    %cst_5 = arith.constant dense<0.000000e+00> : vector<64xf32>
    %5 = vector.multi_reduction <add>, %2, %cst_5 [0] : vector<64x64xf32> to vector<64xf32>
    %6 = vector.shape_cast %5 : vector<64xf32> to vector<1x64xf32>
    %7 = vector.shape_cast %6 : vector<1x64xf32> to vector<1x1x64xf32>
    %c0_6 = arith.constant 0 : index
    %c0_7 = arith.constant 0 : index
    %c0_8 = arith.constant 0 : index
    %8 = vector.load %arg4[%c0_6, %c0_7, %c0_8] : memref<1x1x64xf32, #tpu.memory_space<vmem>>, vector<1x1x64xf32>
    tpu.vector_store %arg4[%c0_6, %c0_7, %c0_8], %7 {strides = array<i32>} : memref<1x1x64xf32, #tpu.memory_space<vmem>>, vector<1x1x64xf32>,
    %9 = arith.mulf %2, %2 : vector<64x64xf32>
    %cst_9 = arith.constant dense<0.000000e+00> : vector<64xf32>
    %10 = vector.multi_reduction <add>, %9, %cst_9 [0] : vector<64x64xf32> to vector<64xf32>
    %11 = vector.shape_cast %10 : vector<64xf32> to vector<1x64xf32>
    %12 = vector.shape_cast %11 : vector<1x64xf32> to vector<1x1x64xf32>
    %c0_10 = arith.constant 0 : index
    %c0_11 = arith.constant 0 : index
    %c0_12 = arith.constant 0 : index
    %13 = vector.load %arg5[%c0_10, %c0_11, %c0_12] : memref<1x1x64xf32, #tpu.memory_space<vmem>>, vector<1x1x64xf32>
    tpu.vector_store %arg5[%c0_10, %c0_11, %c0_12], %12 {strides = array<i32>} : memref<1x1x64xf32, #tpu.memory_space<vmem>>, vector<1x1x64xf32>,
    return
  }
  func.func @transform_0(%arg0: i32) -> (i32, i32) {
    %c0_i32 = arith.constant 0 : i32
    %c0_i32_0 = arith.constant 0 : i32
    return %arg0, %c0_i32 : i32, i32
  }
  func.func @transform_1(%arg0: i32) -> (i32, i32) {
    %c0_i32 = arith.constant 0 : i32
    %c0_i32_0 = arith.constant 0 : i32
    %c0_i32_1 = arith.constant 0 : i32
    return %c0_i32, %c0_i32_0 : i32, i32
  }
  func.func @transform_2(%arg0: i32) -> (i32, i32) {
    %c0_i32 = arith.constant 0 : i32
    %c0_i32_0 = arith.constant 0 : i32
    return %arg0, %c0_i32 : i32, i32
  }
  func.func @transform_3(%arg0: i32) -> (i32, i32, i32) {
    %c0_i32 = arith.constant 0 : i32
    %c0_i32_0 = arith.constant 0 : i32
    %c0_i32_1 = arith.constant 0 : i32
    return %arg0, %c0_i32, %c0_i32_0 : i32, i32, i32
  }
  func.func @transform_4(%arg0: i32) -> (i32, i32, i32) {
    %c0_i32 = arith.constant 0 : i32
    %c0_i32_0 = arith.constant 0 : i32
    %c0_i32_1 = arith.constant 0 : i32
    return %arg0, %c0_i32, %c0_i32_0 : i32, i32, i32
  }
}

</mosaic_0001>

<llo_original>
// kernel: tpu_custom_call.1
$region0: #{tpu_custom_call.1}
  #allocation0 [shape = 'u32[]', space=smem, size = 0x4, offset = 0x4, fixed_abs, tag = 'smem constant byte address 0x4 - core index']
  #allocation1 [shape = 'u32[144,128]{1,0:T(1,128)}', space=vmem, size = 0x12000, scoped, tag = 'internal scratch']
  %s0 = inlined_call_operand.vmem [shape: bf16[128,8], index: 0, kind: input, shape index: {}]
  %s1 = inlined_call_operand.vmem [shape: bf16[8,64], index: 1, kind: input, shape index: {}]
  %s2 = inlined_call_operand.vmem [shape: bf16[128,64], index: 2, kind: output, shape index: {0}]
  %s3 = inlined_call_operand.hbm [shape: f32[2,1,64], index: 3, kind: output, shape index: {1}]
  %s4 = inlined_call_operand.hbm [shape: f32[2,1,64], index: 4, kind: output, shape index: {2}]
  %5 = xla_tuple %s2, %s3, %s4
  %s6 = sld [smem:[#allocation0]]
  $region57: #{tpu_custom_call.1} parent=0
    _
  %s8 = ssub.s32 1, %s6
  %s9 = scalar_select 0, %s8, %s6
  $region1: #{tpu_custom_call.1} parent=0
    #allocation2 [shape = 'u8[1024]{0}', space=vmem, size = 0x400, scoped, tag = 'output window, operand 1']
    #allocation3 [shape = 's32[2]{0}', space=sflag, size = 0x8, scoped, tag = 'scoped memory for tpu_custom_call.1']
    #allocation4 [shape = 'u8[1024]{0}', space=vmem, size = 0x400, scoped, tag = 'output window, operand 2']
    #allocation5 [shape = 's32[2]{0}', space=sflag, size = 0x8, scoped, tag = 'scoped memory for tpu_custom_call.1']
    %10 = vsyncpa [#allocation3], 0
    %s11 = scalar_lea.sflag [#allocation3], 1
    %12 = vsyncpa %s11, 0
    %13 = vsyncpa [#allocation5], 0
    %s14 = scalar_lea.sflag [#allocation5], 1
    %15 = vsyncpa %s14, 0
    loop: start=0, step=1, limit=4
    $region2: #{tpu_custom_call.1} parent=1 // loop_pre_header
      _
    $region3: #{tpu_custom_call.1} parent=1 // loop_header
      %s17 = sphi 0, %s21
      %p18 = scmp.ge.s32.totalorder %s17, 4
      %s27 = sphi 0, %s29
      %s30 = sphi 0, %s27
      %s31 = sphi 0, %s30
      %s47 = sphi 0, %s31
      %s51 = sphi 0, %s51
      %s53 = sphi 0, %s51
      %s54 = sphi 0, %s53
      %s68 = sphi 0, %s54
      %s74 = sphi 0, %s76
      %s77 = sphi 0, %s74
      %s78 = sphi 0, %s77
      %s94 = sphi 0, %s78
      %s100 = sphi 0, %s102
      %s103 = sphi 0, %s100
      %s104 = sphi 0, %s103
      %s120 = sphi 0, %s104
      %s126 = sphi 0, %s128
      %s129 = sphi 0, %s126
      %s130 = sphi 0, %s129
      %s146 = sphi 0, %s130
    $region4: #{tpu_custom_call.1} parent=1 // loop_header_branch
      %20 = sbr.rel (%p18) target = $region8
    $region5: #{tpu_custom_call.1} parent=1 // loop_body
      %s22 = ssub.s32 %s17, 1
      %s23 = ssub.s32 %s17, 2
      %s24 = sadd.s32 %s17, 1
      %s25 = ssub.s32 %s17, %s24
      %p26 = scmp.eq.s32.totalorder %s25, 0
      %s28 = sadd.s32 %s27, 1
      %s29 = scalar_select %p26, %s27, %s28
      %p32 = pneg %p26
      %p33 = scmp.eq.s32.totalorder %s17, 1
      %p34 = por %p32, %p33
      %p35 = scmp.ne.s32.totalorder %s27, %s30
      %p36 = scmp.eq.s32.totalorder %s17, 0
      %p37 = por %p35, %p36
      %p38 = scmp.ne.s32.totalorder %s27, %s30
      %p39 = scmp.eq.s32.totalorder %s22, 1
      %p40 = por %p38, %p39
      %p41 = scmp.ne.s32.totalorder %s30, %s31
      %p42 = scmp.eq.s32.totalorder %s22, 0
      %p43 = por %p41, %p42
      %p44 = scmp.ne.s32.totalorder %s30, %s31
      %p45 = scmp.eq.s32.totalorder %s23, 1
      %p46 = por %p44, %p45
      %p48 = scmp.ne.s32.totalorder %s31, %s47
      %p49 = scmp.eq.s32.totalorder %s23, 0
      %p50 = por %p48, %p49
      %s52 = sadd.s32 %s51, 1
      %p55 = scmp.eq.s32.totalorder %s17, 1
      %p56 = scmp.ne.s32.totalorder %s51, %s53
      %p57 = scmp.eq.s32.totalorder %s17, 0
      %p58 = por %p56, %p57
      %p59 = scmp.ne.s32.totalorder %s51, %s53
      %p60 = scmp.eq.s32.totalorder %s22, 1
      %p61 = por %p59, %p60
      %p62 = scmp.ne.s32.totalorder %s53, %s54
      %p63 = scmp.eq.s32.totalorder %s22, 0
      %p64 = por %p62, %p63
      %p65 = scmp.ne.s32.totalorder %s53, %s54
      %p66 = scmp.eq.s32.totalorder %s23, 1
      %p67 = por %p65, %p66
      %p69 = scmp.ne.s32.totalorder %s54, %s68
      %p70 = scmp.eq.s32.totalorder %s23, 0
      %p71 = por %p69, %p70
      %s72 = ssub.s32 %s17, %s24
      %p73 = scmp.eq.s32.totalorder %s72, 0
      %s75 = sadd.s32 %s74, 1
      %s76 = scalar_select %p73, %s74, %s75
      %p79 = pneg %p73
      %p80 = scmp.eq.s32.totalorder %s17, 1
      %p81 = por %p79, %p80
      %p82 = scmp.ne.s32.totalorder %s74, %s77
      %p83 = scmp.eq.s32.totalorder %s17, 0
      %p84 = por %p82, %p83
      %p85 = scmp.ne.s32.totalorder %s74, %s77
      %p86 = scmp.eq.s32.totalorder %s22, 1
      %p87 = por %p85, %p86
      %p88 = scmp.ne.s32.totalorder %s77, %s78
      %p89 = scmp.eq.s32.totalorder %s22, 0
      %p90 = por %p88, %p89
      %p91 = scmp.ne.s32.totalorder %s77, %s78
      %p92 = scmp.eq.s32.totalorder %s23, 1
      %p93 = por %p91, %p92
      %p95 = scmp.ne.s32.totalorder %s78, %s94
      %p96 = scmp.eq.s32.totalorder %s23, 0
      %p97 = por %p95, %p96
      %s98 = ssub.s32 %s17, %s24
      %p99 = scmp.eq.s32.totalorder %s98, 0
      %s101 = sadd.s32 %s100, 1
      %s102 = scalar_select %p99, %s100, %s101
      %p105 = pneg %p99
      %p106 = scmp.eq.s32.totalorder %s17, 1
      %p107 = por %p105, %p106
      %p108 = scmp.ne.s32.totalorder %s100, %s103
      %p109 = scmp.eq.s32.totalorder %s17, 0
      %p110 = por %p108, %p109
      %p111 = scmp.ne.s32.totalorder %s100, %s103
      %p112 = scmp.eq.s32.totalorder %s22, 1
      %p113 = por %p111, %p112
      %p114 = scmp.ne.s32.totalorder %s103, %s104
      %p115 = scmp.eq.s32.totalorder %s22, 0
      %p116 = por %p114, %p115
      %p117 = scmp.ne.s32.totalorder %s103, %s104
      %p118 = scmp.eq.s32.totalorder %s23, 1
      %p119 = por %p117, %p118
      %p121 = scmp.ne.s32.totalorder %s104, %s120
      %p122 = scmp.eq.s32.totalorder %s23, 0
      %p123 = por %p121, %p122
      %s124 = ssub.s32 %s17, %s24
      %p125 = scmp.eq.s32.totalorder %s124, 0
      %s127 = sadd.s32 %s126, 1
      %s128 = scalar_select %p125, %s126, %s127
      %p131 = pneg %p125
      %p132 = scmp.eq.s32.totalorder %s17, 1
      %p133 = por %p131, %p132
      %p134 = scmp.ne.s32.totalorder %s126, %s129
      %p135 = scmp.eq.s32.totalorder %s17, 0
      %p136 = por %p134, %p135
      %p137 = scmp.ne.s32.totalorder %s126, %s129
      %p138 = scmp.eq.s32.totalorder %s22, 1
      %p139 = por %p137, %p138
      %p140 = scmp.ne.s32.totalorder %s129, %s130
      %p141 = scmp.eq.s32.totalorder %s22, 0
      %p142 = por %p140, %p141
      %p143 = scmp.ne.s32.totalorder %s129, %s130
      %p144 = scmp.eq.s32.totalorder %s23, 1
      %p145 = por %p143, %p144
      %p147 = scmp.ne.s32.totalorder %s130, %s146
      %p148 = scmp.eq.s32.totalorder %s23, 0
      %p149 = por %p147, %p148
      %p150 = scmp.le.s32.totalorder 1, %s17
      %p151 = scmp.lt.s32.totalorder %s17, 3
      %p152 = pnand %p150, %p151
      %p153 = pneg %p152
      // Predicated region
      $region9: #{tpu_custom_call.1} parent=5 // pred_check
        _
      $region10: #{tpu_custom_call.1} parent=5 // pred_check_branch
        %155 = sbr.rel (%p152) target = $region12
      $region11: #{tpu_custom_call.1} parent=5 // pred_region
        %s156 = ssub.s32 %s17, 1
        // Predicated region
        $region13: #{tpu_custom_call.1} parent=11 // pred_check
          %p157 = pneg %p64
        $region14: #{tpu_custom_call.1} parent=11 // pred_check_branch
          %159 = sbr.rel (%p157) target = $region16
        $region15: #{tpu_custom_call.1} parent=11 // pred_region
          _
        $region16: #{tpu_custom_call.1} parent=11 // pred_fallthru
          _
      $region12: #{tpu_custom_call.1} parent=5 // pred_fallthru
        _
      %p160 = scmp.lt.s32.totalorder %s17, 2
      // Predicated region
      $region17: #{tpu_custom_call.1} parent=5 // pred_check
        %p161 = pneg %p160
      $region18: #{tpu_custom_call.1} parent=5 // pred_check_branch
        %163 = sbr.rel (%p161) target = $region20
      $region19: #{tpu_custom_call.1} parent=5 // pred_region
        // Predicated region
        $region21: #{tpu_custom_call.1} parent=19 // pred_check
          %p164 = pneg %p37
        $region22: #{tpu_custom_call.1} parent=19 // pred_check_branch
          %166 = sbr.rel (%p164) target = $region24
        $region23: #{tpu_custom_call.1} parent=19 // pred_region
          %s167 = smul.u32 8, %s17
          %p168 = scmp.lt.s32.totalorder %s167, 15
          %s169 = scalar_select %p168, %s167, 15
          %s170 = smul.addr %s169, 4
          %s171 = scalar_lea.vmem %s0, %s170
          %s172 = smul.u32 8, %s17
        $region24: #{tpu_custom_call.1} parent=19 // pred_fallthru
          _
      $region20: #{tpu_custom_call.1} parent=5 // pred_fallthru
        _
      %p173 = scmp.le.s32.totalorder 1, %s17
      %p174 = scmp.lt.s32.totalorder %s17, 3
      %p175 = pnand %p173, %p174
      %p176 = pneg %p175
      // Predicated region
      $region25: #{tpu_custom_call.1} parent=5 // pred_check
        _
      $region26: #{tpu_custom_call.1} parent=5 // pred_check_branch
        %178 = sbr.rel (%p175) target = $region28
      $region27: #{tpu_custom_call.1} parent=5 // pred_region
        %s179 = ssub.s32 %s17, 1
        %s180 = smul.u32 8, %s22
        %p181 = scmp.lt.s32.totalorder %s180, 15
        %s182 = scalar_select %p181, %s180, 15
        %s183 = smul.addr %s182, 4
        %s184 = scalar_lea.vmem %s0, %s183
        %p185 = pneg %p43
        %p186 = pneg %p40
        %p187 = pneg %p64
        %p188 = pneg %p61
        %p189 = pneg %p90
        %p190 = pneg %p87
        %s191 = smul.u32 8, %s22
        %p192 = scmp.lt.s32.totalorder %s191, 15
        %s193 = scalar_select %p192, %s191, 15
        %s194 = smul.addr %s193, 4
        %s195 = scalar_lea.vmem %s2, %s194
        %p196 = pneg %p116
        %p197 = pneg %p113
        %s198 = sand.u32 %s103, 1
        %s199 = scalar_lea.sflag [#allocation3], %s198
        %s200 = sand.u32 %s103, 1
        %s201 = scalar_lea.vmem [#allocation2], %s200
        %p202 = pneg %p142
        %p203 = pneg %p139
        %s204 = sand.u32 %s129, 1
        %s205 = scalar_lea.sflag [#allocation5], %s204
        %s206 = sand.u32 %s129, 1
        %s207 = scalar_lea.vmem [#allocation4], %s206
        %s208 = smul.u32 8, %s22
        %p209 = scmp.lt.s32.totalorder %s208, 15
        %s210 = scalar_select %p209, %s208, 15
        %s211 = smul.addr %s210, 4
        %s212 = scalar_lea.vmem %s0, %s211
        %s213 = smul.u32 8, %s22
        %s214 = smul.u32 8, %s22
        %p215 = scmp.lt.s32.totalorder %s214, 15
        %s216 = scalar_select %p215, %s214, 15
        %s217 = smul.addr %s216, 4
        %s218 = scalar_lea.vmem %s2, %s217
        %s219 = smul.u32 8, %s22
        %v221 = vld [vmem:[%s212] sm:$0xf]
        %v222 = vld [vmem:[%s212 + $0x4] sm:$0xf]
        %v223 = vld [vmem:[%s212 + $0x8] sm:$0xf]
        %v224 = vld [vmem:[%s212 + $0xc] sm:$0xf]
        %v225 = vld [vmem:[%s212 + $0x10] sm:$0xf]
        %v226 = vld [vmem:[%s212 + $0x14] sm:$0xf]
        %v227 = vld [vmem:[%s212 + $0x18] sm:$0xf]
        %v228 = vld [vmem:[%s212 + $0x1c] sm:$0xf]
        %v229 = vld [vmem:[%s1] sm:$0xf]
        %v238 = vunpack.c.l.b16 %v221
        %v239 = vunpack.c.l.b16 %v222
        %v240 = vunpack.c.l.b16 %v223
        %v241 = vunpack.c.l.b16 %v224
        %v242 = vunpack.c.l.b16 %v225
        %v243 = vunpack.c.l.b16 %v226
        %v244 = vunpack.c.l.b16 %v227
        %v245 = vunpack.c.l.b16 %v228
        %v246 = vpack.c.b16 %v239, %v238
        %v247 = vpack.c.b16 %v241, %v240
        %v248 = vpack.c.b16 %v243, %v242
        %v249 = vpack.c.b16 %v245, %v244
        %vm250 = vcmask 64512
        %v252 = vsel %vm250, %v246, 0
        %v255 = vsel %vm250, %v247, 0
        %v258 = vsel %vm250, %v248, 0
        %v261 = vsel %vm250, %v249, 0
        %vm263 = vcmask 1043456
        %v265 = vsel %vm263, %v229, 0
        %267 = vmatprep.subr.bf16.mxu0 0
        %268 = vmatpush1.bf16.msra.mxu0 0
        %269 = vmatprep.subr.bf16.mxu0 0
        %270 = vmatpush1.bf16.msra.mxu0 0
        %271 = vmatprep.subr.bf16.mxu0 0
        %272 = vmatpush1.bf16.msra.mxu0 0
        %273 = vmatprep.subr.bf16.mxu0 0
        %274 = vmatpush1.bf16.msra.mxu0 0
        %275 = vmatprep.subr.bf16.mxu0 0
        %276 = vmatpush1.bf16.msra.mxu0 0
        %277 = vmatprep.subr.bf16.mxu0 0
        %278 = vmatpush1.bf16.msra.mxu0 0
        %279 = vmatprep.subr.bf16.mxu0 0
        %280 = vmatpush1.bf16.msra.mxu0 0
        %281 = vmatprep.subr.bf16.mxu0 0
        %282 = vmatpush1.bf16.msra.mxu0 %v265
        %283 = vmatprep.subr.bf16.mxu0 0
        %284 = vmatpush2.bf16.msra.mxu0 0
        %285 = vmatprep.subr.bf16.mxu0 0
        %286 = vmatpush2.bf16.msra.mxu0 0
        %287 = vmatprep.subr.bf16.mxu0 0
        %288 = vmatpush2.bf16.msra.mxu0 0
        %289 = vmatprep.subr.bf16.mxu0 0
        %290 = vmatpush2.bf16.msra.mxu0 0
        %291 = vmatprep.subr.bf16.mxu0 0
        %292 = vmatpush2.bf16.msra.mxu0 0
        %293 = vmatprep.subr.bf16.mxu0 0
        %294 = vmatpush2.bf16.msra.mxu0 0
        %295 = vmatprep.subr.bf16.mxu0 0
        %296 = vmatpush2.bf16.msra.mxu0 0
        %297 = vmatprep.subr.bf16.mxu0 0
        %298 = vmatpush2.bf16.msra.mxu0 0
        %299 = vmatprep.mubr.bf16.mxu0 0
        %300 = vmatmul.mubr.bf16.gmra.mxu0 %v252
        %v301 = vpop.f32.mrf.mxu0
        %v302 = vadd.f32 0.0, %v301
        %v303 = vpop.f32.mrf.mxu0
        %v304 = vpop.f32.mrf.mxu0
        %v305 = vadd.f32 0.0, %v304
        %v306 = vpop.f32.mrf.mxu0
        %307 = vmatprep.mubr.bf16.mxu0 0
        %308 = vmatmul.mubr.bf16.gmra.mxu0 %v255
        %v309 = vpop.f32.mrf.mxu0
        %v310 = vadd.f32 0.0, %v309
        %v311 = vpop.f32.mrf.mxu0
        %v312 = vpop.f32.mrf.mxu0
        %v313 = vadd.f32 0.0, %v312
        %v314 = vpop.f32.mrf.mxu0
        %315 = vmatprep.mubr.bf16.mxu0 0
        %316 = vmatmul.mubr.bf16.gmra.mxu0 %v258
        %v317 = vpop.f32.mrf.mxu0
        %v318 = vadd.f32 0.0, %v317
        %v319 = vpop.f32.mrf.mxu0
        %v320 = vpop.f32.mrf.mxu0
        %v321 = vadd.f32 0.0, %v320
        %v322 = vpop.f32.mrf.mxu0
        %323 = vmatprep.mubr.bf16.mxu0 0
        %324 = vmatmul.mubr.bf16.gmra.mxu0 %v261
        %v325 = vpop.f32.mrf.mxu0
        %v326 = vadd.f32 0.0, %v325
        %v327 = vpop.f32.mrf.mxu0
        %v328 = vpop.f32.mrf.mxu0
        %v329 = vadd.f32 0.0, %v328
        %v330 = vpop.f32.mrf.mxu0
        %331 = vdwg.mxu0
        %v332 = vpack.c.bf16 %v305, %v302
        %v333 = vpack.c.bf16 %v313, %v310
        %v334 = vpack.c.bf16 %v321, %v318
        %v335 = vpack.c.bf16 %v329, %v326
        %v340 = vunpack.c.l.b16 %v332
        %v341 = vunpack.c.h.b16 %v332
        %v342 = vunpack.c.l.b16 %v333
        %v343 = vunpack.c.h.b16 %v333
        %v344 = vunpack.c.l.b16 %v334
        %v345 = vunpack.c.h.b16 %v334
        %v346 = vunpack.c.l.b16 %v335
        %v347 = vunpack.c.h.b16 %v335
        %v348 = vpack.c.b16 %v340, %v340
        %v349 = vpack.c.b16 %v341, %v341
        %v350 = vpack.c.b16 %v342, %v342
        %v351 = vpack.c.b16 %v343, %v343
        %v352 = vpack.c.b16 %v344, %v344
        %v353 = vpack.c.b16 %v345, %v345
        %v354 = vpack.c.b16 %v346, %v346
        %v355 = vpack.c.b16 %v347, %v347
        %vm364 = vcmask 519168
        %365 = vst.msk [vmem:[%s218] sm:$0xf] %vm364, %v348
        %366 = vst.msk [vmem:[%s218 + $0x4] sm:$0xf] %vm364, %v349
        %367 = vst.msk [vmem:[%s218 + $0x8] sm:$0xf] %vm364, %v350
        %368 = vst.msk [vmem:[%s218 + $0xc] sm:$0xf] %vm364, %v351
        %369 = vst.msk [vmem:[%s218 + $0x10] sm:$0xf] %vm364, %v352
        %370 = vst.msk [vmem:[%s218 + $0x14] sm:$0xf] %vm364, %v353
        %371 = vst.msk [vmem:[%s218 + $0x18] sm:$0xf] %vm364, %v354
        %372 = vst.msk [vmem:[%s218 + $0x1c] sm:$0xf] %vm364, %v355
        %vm373 = vcmask 523264
        %v374 = vsel %vm373, %v302, 0.0
        %v375 = vsel %vm373, %v305, 0.0
        %v376 = vadd.f32 %v374, %v375
        %v377 = vsel %vm373, %v310, 0.0
        %v378 = vadd.f32 %v376, %v377
        %v379 = vsel %vm373, %v313, 0.0
        %v380 = vadd.f32 %v378, %v379
        %v381 = vsel %vm373, %v318, 0.0
        %v382 = vadd.f32 %v380, %v381
        %v383 = vsel %vm373, %v321, 0.0
        %v384 = vadd.f32 %v382, %v383
        %v385 = vsel %vm373, %v326, 0.0
        %v386 = vadd.f32 %v384, %v385
        %v387 = vsel %vm373, %v329, 0.0
        %v388 = vadd.f32 %v386, %v387
        %v389 = vrot.slane %v388, 4
        %v390 = vadd.f32 %v388, %v389
        %v391 = vrot.slane %v390, 2
        %v392 = vadd.f32 %v390, %v391
        %v393 = vrot.slane %v392, 1
        %v394 = vadd.f32 %v392, %v393
        %vm395 = vcmask 516096
        %396 = vst.msk [vmem:[%s201] sm:$0x1] %vm395, %v394
        %v397 = vmul.f32 %v302, %v302
        %v398 = vmul.f32 %v305, %v305
        %v399 = vmul.f32 %v310, %v310
        %v400 = vmul.f32 %v313, %v313
        %v401 = vmul.f32 %v318, %v318
        %v402 = vmul.f32 %v321, %v321
        %v403 = vmul.f32 %v326, %v326
        %v404 = vmul.f32 %v329, %v329
        %v405 = vsel %vm373, %v397, 0.0
        %v406 = vsel %vm373, %v398, 0.0
        %v407 = vadd.f32 %v405, %v406
        %v408 = vsel %vm373, %v399, 0.0
        %v409 = vadd.f32 %v407, %v408
        %v410 = vsel %vm373, %v400, 0.0
        %v411 = vadd.f32 %v409, %v410
        %v412 = vsel %vm373, %v401, 0.0
        %v413 = vadd.f32 %v411, %v412
        %v414 = vsel %vm373, %v402, 0.0
        %v415 = vadd.f32 %v413, %v414
        %v416 = vsel %vm373, %v403, 0.0
        %v417 = vadd.f32 %v415, %v416
        %v418 = vsel %vm373, %v404, 0.0
        %v419 = vadd.f32 %v417, %v418
        %v420 = vrot.slane %v419, 4
        %v421 = vadd.f32 %v419, %v420
        %v422 = vrot.slane %v421, 2
        %v423 = vadd.f32 %v421, %v422
        %v424 = vrot.slane %v423, 1
        %v425 = vadd.f32 %v423, %v424
        %426 = vst.msk [vmem:[%s207] sm:$0x1] %vm395, %v425
        %s427 = smul.u32 8, %s22
        %p428 = scmp.lt.s32.totalorder %s427, 15
        %s429 = scalar_select %p428, %s427, 15
        %s430 = smul.addr %s429, 4
        %s431 = scalar_lea.vmem %s2, %s430
        %s432 = sand.u32 %s103, 1
        %s433 = scalar_lea.sflag [#allocation3], %s432
        %s434 = sand.u32 %s103, 1
        %s435 = scalar_lea.vmem [#allocation2], %s434
        %s436 = sand.u32 %s129, 1
        %s437 = scalar_lea.sflag [#allocation5], %s436
        %s438 = sand.u32 %s129, 1
        %s439 = scalar_lea.vmem [#allocation4], %s438
        // Predicated region
        $region29: #{tpu_custom_call.1} parent=27 // pred_check
          %p440 = pneg %p87
        $region30: #{tpu_custom_call.1} parent=27 // pred_check_branch
          %442 = sbr.rel (%p440) target = $region32
        $region31: #{tpu_custom_call.1} parent=27 // pred_region
          %s443 = smul.u32 8, %s22
        $region32: #{tpu_custom_call.1} parent=27 // pred_fallthru
          _
        // Predicated region
        $region33: #{tpu_custom_call.1} parent=27 // pred_check
          %p444 = pneg %p113
        $region34: #{tpu_custom_call.1} parent=27 // pred_check_branch
          %446 = sbr.rel (%p444) target = $region36
        $region35: #{tpu_custom_call.1} parent=27 // pred_region
          %s448 = ssub.s32 16, 16
          %449 = vsyncadd %s433, %s448
          %s450 = smul.addr %s22, 16
          %s451 = scalar_lea.hbm %s3, %s450
          %s453 = sshll.u32 %s435, 4
          %s454 = int_to_ptr.vmem [resolvable:$true] %s453
          %456 = dma.vmem_to_hbm [thread:$0]  %s454, 16, %s451, %s433
        $region36: #{tpu_custom_call.1} parent=27 // pred_fallthru
          _
        // Predicated region
        $region37: #{tpu_custom_call.1} parent=27 // pred_check
          %p457 = pneg %p139
        $region38: #{tpu_custom_call.1} parent=27 // pred_check_branch
          %459 = sbr.rel (%p457) target = $region40
        $region39: #{tpu_custom_call.1} parent=27 // pred_region
          %s461 = ssub.s32 16, 16
          %462 = vsyncadd %s437, %s461
          %s463 = smul.addr %s22, 16
          %s464 = scalar_lea.hbm %s4, %s463
          %s466 = sshll.u32 %s439, 4
          %s467 = int_to_ptr.vmem [resolvable:$true] %s466
          %469 = dma.vmem_to_hbm [thread:$0]  %s467, 16, %s464, %s437
        $region40: #{tpu_custom_call.1} parent=27 // pred_fallthru
          _
      $region28: #{tpu_custom_call.1} parent=5 // pred_fallthru
        _
      %p470 = scmp.le.s32.totalorder 2, %s17
      // Predicated region
      $region41: #{tpu_custom_call.1} parent=5 // pred_check
        %p471 = pneg %p470
      $region42: #{tpu_custom_call.1} parent=5 // pred_check_branch
        %473 = sbr.rel (%p471) target = $region44
      $region43: #{tpu_custom_call.1} parent=5 // pred_region
        %s474 = ssub.s32 %s17, 2
        // Predicated region
        $region45: #{tpu_custom_call.1} parent=43 // pred_check
          %p475 = pneg %p93
        $region46: #{tpu_custom_call.1} parent=43 // pred_check_branch
          %477 = sbr.rel (%p475) target = $region48
        $region47: #{tpu_custom_call.1} parent=43 // pred_region
          %s478 = smul.u32 8, %s23
          %p479 = scmp.lt.s32.totalorder %s478, 15
          %s480 = scalar_select %p479, %s478, 15
          %s481 = smul.addr %s480, 4
          %s482 = scalar_lea.vmem %s2, %s481
        $region48: #{tpu_custom_call.1} parent=43 // pred_fallthru
          _
        // Predicated region
        $region49: #{tpu_custom_call.1} parent=43 // pred_check
          %p483 = pneg %p119
        $region50: #{tpu_custom_call.1} parent=43 // pred_check_branch
          %485 = sbr.rel (%p483) target = $region52
        $region51: #{tpu_custom_call.1} parent=43 // pred_region
          %s486 = sand.u32 %s104, 1
          %s487 = scalar_lea.sflag [#allocation3], %s486
          %s488 = sand.u32 %s104, 1
          %s489 = scalar_lea.vmem [#allocation2], %s488
          %490 = dma.done %s487, 16
        $region52: #{tpu_custom_call.1} parent=43 // pred_fallthru
          _
        // Predicated region
        $region53: #{tpu_custom_call.1} parent=43 // pred_check
          %p491 = pneg %p145
        $region54: #{tpu_custom_call.1} parent=43 // pred_check_branch
          %493 = sbr.rel (%p491) target = $region56
        $region55: #{tpu_custom_call.1} parent=43 // pred_region
          %s494 = sand.u32 %s130, 1
          %s495 = scalar_lea.sflag [#allocation5], %s494
          %s496 = sand.u32 %s130, 1
          %s497 = scalar_lea.vmem [#allocation4], %s496
          %498 = dma.done %s495, 16
        $region56: #{tpu_custom_call.1} parent=43 // pred_fallthru
          _
      $region44: #{tpu_custom_call.1} parent=5 // pred_fallthru
        _
    $region6: #{tpu_custom_call.1} parent=1 // loop_footer
      %s21 = sadd.s32 1, %s17
    $region7: #{tpu_custom_call.1} parent=1 // loop_footer_branch
      %16 = sbr.rel target = $region3
    $region8: #{tpu_custom_call.1} parent=1 // loop_exit
      _
    %499 = vsyncpa [#allocation3], 1
    %s500 = scalar_lea.sflag [#allocation3], 1
    %501 = vsyncpa %s500, 1
    %502 = vsyncpa [#allocation5], 1
    %s503 = scalar_lea.sflag [#allocation5], 1
    %504 = vsyncpa %s503, 1

</llo_original>
